<compile_context>
chip_gen: v7x
topology: tpu7x:2x2x1
jax: 0.10.0
libtpu: 0.0.40
codegen_flags: <defaults>
</compile_context>

<pallas_src>
import jax
import jax.numpy as jnp
from jax import lax
from jax.experimental import pallas as pl
from jax.experimental.pallas import tpu as pltpu

EPS = 1e-5  # nn.BatchNorm2d default eps
_MIB = 1024 * 1024


def _make_kernel(*, inv_count, inv_tile, resident):
    """inv_count = 1/(half*S); inv_tile = 1/(tn*ts).

    resident=True: phase 1 reads the half from a persistent VMEM copy filled
    during phase 0 instead of re-reading HBM.
    """

    def kernel(x_ref, gamma_ref, beta_ref, o_ref,
               sum_ref, sumsq_ref, shift_ref, scale_ref, bias_ref,
               *maybe_resident):
        resid_ref = maybe_resident[0] if resident else None
        phase = pl.program_id(1)   # 0: stats pass, 1: normalize pass
        n = pl.program_id(2)       # row (batch) tile within the half
        s = pl.program_id(3)       # spatial (lane) chunk
        last_n = pl.num_programs(2) - 1
        last_s = pl.num_programs(3) - 1

        @pl.when(phase == 0)
        def _stats():
            xt = x_ref[...].astype(jnp.float32)               # (tn, C, ts)

            @pl.when(jnp.logical_and(n == 0, s == 0))
            def _init():
                sum_ref[...] = jnp.zeros_like(sum_ref)
                sumsq_ref[...] = jnp.zeros_like(sumsq_ref)
                # Per-channel shift from the first tile: shifted-data variance
                # accumulation stays accurate when |mean| >> std.
                shift_ref[...] = (jnp.sum(jnp.sum(xt, axis=0), axis=1,
                                          keepdims=True) * inv_tile)

            xc = xt - shift_ref[...][None, :, :]              # (tn, C, ts)
            # (C, 1) accumulators: C on sublanes matches the tile layout, so
            # the lane-axis reduce/broadcast never crosses lanes.
            sum_ref[...] += jnp.sum(jnp.sum(xc, axis=0), axis=1, keepdims=True)
            sumsq_ref[...] += jnp.sum(jnp.sum(xc * xc, axis=0), axis=1,
                                      keepdims=True)

            if resident:
                resid_ref[n] = x_ref[...]        # keep this half in VMEM

            @pl.when(jnp.logical_and(n == last_n, s == last_s))
            def _finalize():
                mean_c = sum_ref[...] * inv_count             # E[x - shift]
                var = sumsq_ref[...] * inv_count - mean_c * mean_c
                inv_std = lax.rsqrt(var + EPS)
                g = gamma_ref[...].astype(jnp.float32)        # (C, 1)
                b = beta_ref[...].astype(jnp.float32)
                sc = g * inv_std
                scale_ref[...] = sc
                bias_ref[...] = b - (shift_ref[...] + mean_c) * sc

        @pl.when(phase == 1)
        def _normalize():
            if resident:
                xt = resid_ref[n].astype(jnp.float32)
            else:
                xt = x_ref[...].astype(jnp.float32)
            # Affine kept in f32 (safe on v5e with no bf16 VALU); the kernel is
            # HBM-bound so the extra casts sit in VALU slack.
            y = (xt * scale_ref[...][None, :, :]
                 + bias_ref[...][None, :, :])
            o_ref[...] = y.astype(o_ref.dtype)

    return kernel


def _vmem_capacity_bytes():
    try:
        return int(pltpu.get_tpu_info().vmem_capacity_bytes)
    except Exception:
        return 64 * _MIB  # conservative (v7x per-TensorCore)


def _plan_tiles(half, C, S, dsize, target_bytes, hard_cap_bytes):
    """Pick (tn, ts): batch rows per tile and lane-dense spatial chunk."""
    per_sample = C * S * dsize
    if per_sample <= target_bytes:
        ts = S
        divs = [d for d in range(1, half + 1) if half % d == 0]
        fit = [d for d in divs if d * per_sample <= hard_cap_bytes]
        under = [d for d in fit if d * per_sample <= target_bytes]
        tn = max(under) if under else 1
        # Awkward (e.g. prime) halves: rather than many tiny grid steps,
        # overshoot toward the hard cap if a bigger divisor still fits.
        if tn * per_sample * 4 < target_bytes:
            over = [d for d in fit if d * per_sample > target_bytes]
            if over:
                tn = min(over)
        return tn, ts
    # Sample exceeds the tile budget: chunk the lane (spatial) axis in
    # 128-multiples so stores stay unmasked and DMAs stay long.
    cands = [d for d in range(128, S, 128) if S % d == 0]
    fit = [d for d in cands if C * d * dsize <= hard_cap_bytes]
    under = [d for d in fit if C * d * dsize <= target_bytes]
    if under:
        return 1, max(under)
    if fit:
        return 1, min(fit)
    # No lane-dense divisor of S fits; fall back to the full row and rely on
    # the raised VMEM limit.  (Masked partial tail chunks not implemented.)
    return 1, S


def batch_norm_pair(x, gamma, beta, *, target_tile_bytes=None,
                    allow_resident=True, core_parallel=False):
    """Forward pass of the `batchNorm` module.

    x:     (L, C, H, W)  NCHW, L must be even (matches the PyTorch l//2 split).
    gamma: (2, C)  [bn1.weight, bn2.weight]
    beta:  (2, C)  [bn1.bias,   bn2.bias]
    core_parallel: mark the halves grid axis CORE_PARALLEL (v7x, 2 TCs/chip).
    returns (L, C, H, W)
    """
    L, C, H, W = x.shape
    assert L % 2 == 0 and L >= 2, "batch must be even so the halves match"
    half = L // 2
    S = H * W
    dsize = jnp.dtype(x.dtype).itemsize

    # Free reshapes (no data movement): spatial axis lands on the lane dim,
    # gamma/beta become (2, C, 1) so they match the (C, 1) accumulator layout.
    xv = x.reshape(2, half, C, S)
    gv = gamma.reshape(2, C, 1)
    bv = beta.reshape(2, C, 1)

    # Generation-aware VMEM budget: ~48 MiB on v7x (64 MiB/TC), ~96 MiB on
    # v5e/v6e (128 MiB).  Tile hard cap keeps 4x double-buffered tiles well
    # inside the limit.
    usable = min(int(_vmem_capacity_bytes() * 3 // 4), 96 * _MIB)
    hard_cap_tile = max(usable // 6, 1 * _MIB)
    per_half_bytes = half * C * S * dsize

    def plan(tgt):
        tn_, ts_ = _plan_tiles(half, C, S, dsize, tgt, hard_cap_tile)
        tile_bytes_ = tn_ * C * ts_ * dsize
        res_ = (allow_resident and ts_ == S
                and per_half_bytes + 4 * tile_bytes_ + 4 * _MIB <= usable)
        return tn_, ts_, tile_bytes_, res_

    tgt0 = target_tile_bytes if target_tile_bytes is not None else 6 * _MIB
    tn, ts, tile_bytes, resident = plan(tgt0)
    if target_tile_bytes is None and not resident and usable >= 80 * _MIB:
        # v5e/v6e, non-resident: larger tiles amortize per-step overhead.
        tn, ts, tile_bytes, resident = plan(12 * _MIB)

    n_tiles = half // tn
    s_tiles = S // ts

    kernel = _make_kernel(inv_count=1.0 / float(half * S),
                          inv_tile=1.0 / float(tn * ts),
                          resident=resident)

    if resident:
        # During phase 1 the input block index is pinned, so no new input DMA
        # is issued; the half is re-read from the resident VMEM copy instead.
        x_index = lambda h, p, n, s: (h, (1 - p) * n, 0, (1 - p) * s)
    else:
        x_index = lambda h, p, n, s: (h, n, 0, s)

    scratch = [
        pltpu.VMEM((C, 1), jnp.float32),   # shifted sum
        pltpu.VMEM((C, 1), jnp.float32),   # shifted sum of squares
        pltpu.VMEM((C, 1), jnp.float32),   # shift (first-tile mean)
        pltpu.VMEM((C, 1), jnp.float32),   # folded scale = gamma * inv_std
        pltpu.VMEM((C, 1), jnp.float32),   # folded bias  = beta - mean*scale
    ]
    if resident:
        scratch.append(pltpu.VMEM((n_tiles, tn, C, S), x.dtype))

    total = L * C * S
    reads = 1 if resident else 2
    cost = pl.CostEstimate(
        flops=7 * total,
        transcendentals=2 * C,
        bytes_accessed=(reads + 1) * total * dsize + 4 * C * dsize,
    )

    halves_sem = pltpu.CORE_PARALLEL if core_parallel else "parallel"

    out = pl.pallas_call(
        kernel,
        out_shape=jax.ShapeDtypeStruct((2, half, C, S), x.dtype),
        grid_spec=pltpu.PrefetchScalarGridSpec(
            num_scalar_prefetch=0,
            grid=(2, 2, n_tiles, s_tiles),   # (half, phase, row tile, S chunk)
            in_specs=[
                pl.BlockSpec((None, tn, C, ts), x_index),
                pl.BlockSpec((None, C, 1), lambda h, p, n, s: (h, 0, 0)),
                pl.BlockSpec((None, C, 1), lambda h, p, n, s: (h, 0, 0)),
            ],
            # During the stats phase (p == 0) the output block index is pinned
            # to tile (h, 0, 0, 0), so unwritten output buffers are never
            # flushed to HBM; phase 1 then writes every tile exactly once.
            out_specs=pl.BlockSpec((None, tn, C, ts),
                                   lambda h, p, n, s: (h, p * n, 0, p * s)),
            scratch_shapes=scratch,
        ),
        compiler_params=pltpu.CompilerParams(
            dimension_semantics=(halves_sem, "arbitrary", "arbitrary",
                                 "arbitrary"),
            vmem_limit_bytes=usable,
        ),
        cost_estimate=cost,
    )(xv, gv, bv)

    return out.reshape(L, C, H, W)


def _reference(x, gamma, beta):
    """Pure-JAX reference matching training-mode BatchNorm2d on each half."""
    L = x.shape[0]
    half = L // 2
    outs = []
    for i, xh in enumerate((x[:half], x[half:])):
        xh = xh.astype(jnp.float32)
        mean = jnp.mean(xh, axis=(0, 2, 3), keepdims=True)
        var = jnp.mean((xh - mean) ** 2, axis=(0, 2, 3), keepdims=True)
        g = gamma[i].reshape(1, -1, 1, 1)
        b = beta[i].reshape(1, -1, 1, 1)
        outs.append((xh - mean) / jnp.sqrt(var + EPS) * g + b)
    return jnp.concatenate(outs, axis=0).astype(x.dtype)


if __name__ == "__main__":
    key = jax.random.PRNGKey(0)
    k0, k1, k2, k3 = jax.random.split(key, 4)

    # Small shapes consistent with the module: batch=4, channels=8, spatial=16.
    L, C, H, W = 4, 8, 16, 16
    x = jax.random.normal(k0, (L, C, H, W), dtype=jnp.float32)
    gamma = 1.0 + 0.1 * jax.random.normal(k1, (2, C), dtype=jnp.float32)
    beta = 0.1 * jax.random.normal(k2, (2, C), dtype=jnp.float32)

    # 1) Default plan: whole half per tile, VMEM-resident second pass.
    out = jax.block_until_ready(batch_norm_pair(x, gamma, beta))
    ref = _reference(x, gamma, beta)
    assert out.shape == (L, C, H, W)
    assert jnp.allclose(out, ref, atol=1e-4, rtol=1e-4), "mismatch (resident)"

    # 2) Multi-tile two-read path (resident disabled, one sample per tile):
    #    exercises multi-tile accumulation and the phase-pinned output spec.
    L2 = 8
    x2 = jax.random.normal(k3, (L2, C, H, W), dtype=jnp.float32)
    ref2 = _reference(x2, gamma, beta)
    per_sample = C * H * W * 4
    out2 = jax.block_until_ready(
        batch_norm_pair(x2, gamma, beta, target_tile_bytes=per_sample,
                        allow_resident=False))
    assert jnp.allclose(out2, ref2, atol=1e-4, rtol=1e-4), "mismatch (2-read)"

    # 3) Multi-tile resident path (dynamic resid_ref[n] store/load).
    out3 = jax.block_until_ready(
        batch_norm_pair(x2, gamma, beta, target_tile_bytes=per_sample))
    assert jnp.allclose(out3, ref2, atol=1e-4, rtol=1e-4), \
        "mismatch (resident multi-tile)"

    # 4) Spatial (lane) chunking path: per-sample larger than the tile budget.
    out4 = jax.block_until_ready(
        batch_norm_pair(x2, gamma, beta, target_tile_bytes=per_sample // 2))
    assert jnp.allclose(out4, ref2, atol=1e-4, rtol=1e-4), "mismatch (S-tiled)"

    # TODO(synk): running_mean/running_var momentum updates (stateful nn.Module
    # buffers) are not materialized; they do not affect the training-mode
    # forward output.
    print("KERNEL_OK")
</pallas_src>

<mosaic_0001>
module attributes {stable_mosaic.version = 11 : i64} {
  func.func @kernel(%arg0: i32, %arg1: i32, %arg2: i32, %arg3: i32, %arg4: memref<1x2x8x256xf32, #tpu.memory_space<vmem>>, %arg5: memref<1x8x1xf32, #tpu.memory_space<vmem>>, %arg6: memref<1x8x1xf32, #tpu.memory_space<vmem>>, %arg7: memref<1x2x8x256xf32, #tpu.memory_space<vmem>>, %arg8: memref<8x1xf32, #tpu.memory_space<vmem>>, %arg9: memref<8x1xf32, #tpu.memory_space<vmem>>, %arg10: memref<8x1xf32, #tpu.memory_space<vmem>>, %arg11: memref<8x1xf32, #tpu.memory_space<vmem>>, %arg12: memref<8x1xf32, #tpu.memory_space<vmem>>, %arg13: memref<1x2x8x256xf32, #tpu.memory_space<vmem>>) attributes {dimension_semantics = [#tpu.dimension_semantics<parallel>, #tpu.dimension_semantics<arbitrary>, #tpu.dimension_semantics<arbitrary>, #tpu.dimension_semantics<arbitrary>], iteration_bounds = array<i64: 2, 2, 1, 1>, scalar_prefetch = 0 : i64, scratch_operands = 6 : i64, tpu.core_type = #tpu.core_type<tc>, window_params = [{transform_indices = @transform_0, window_bounds = array<i64: 1, 2, 8, 256>}, {transform_indices = @transform_1, window_bounds = array<i64: 1, 8, 1>}, {transform_indices = @transform_2, window_bounds = array<i64: 1, 8, 1>}, {transform_indices = @transform_3, window_bounds = array<i64: 1, 2, 8, 256>}]} {
    %c0_i32 = arith.constant 0 : i32
    %0 = arith.cmpi eq, %arg1, %c0_i32 : i32
    %1 = arith.extui %0 : i1 to i32
    %c0_i32_0 = arith.constant 0 : i32
    %2 = arith.cmpi ne, %1, %c0_i32_0 : i32
    scf.if %2 {
      %c0 = arith.constant 0 : index
      %c0_2 = arith.constant 0 : index
      %c0_3 = arith.constant 0 : index
      %c0_4 = arith.constant 0 : index
      %6 = vector.load %arg4[%c0, %c0_2, %c0_3, %c0_4] : memref<1x2x8x256xf32, #tpu.memory_space<vmem>>, vector<1x2x8x256xf32>
      %7 = vector.shape_cast %6 : vector<1x2x8x256xf32> to vector<2x8x256xf32>
      %c0_i32_5 = arith.constant 0 : i32
      %8 = arith.cmpi eq, %arg2, %c0_i32_5 : i32
      %c0_i32_6 = arith.constant 0 : i32
      %9 = arith.cmpi eq, %arg3, %c0_i32_6 : i32
      %10 = arith.andi %8, %9 : i1
      %11 = arith.extui %10 : i1 to i32
      %c0_i32_7 = arith.constant 0 : i32
      %12 = arith.cmpi ne, %11, %c0_i32_7 : i32
      scf.if %12 {
        %cst_31 = arith.constant 0.000000e+00 : f32
        %41 = vector.broadcast %cst_31 : f32 to vector<8x1xf32>
        %c0_32 = arith.constant 0 : index
        %c0_33 = arith.constant 0 : index
        %42 = vector.load %arg8[%c0_32, %c0_33] : memref<8x1xf32, #tpu.memory_space<vmem>>, vector<8x1xf32>
        tpu.vector_store %arg8[%c0_32, %c0_33], %41 {strides = array<i32>} : memref<8x1xf32, #tpu.memory_space<vmem>>, vector<8x1xf32>,
        %cst_34 = arith.constant 0.000000e+00 : f32
        %43 = vector.broadcast %cst_34 : f32 to vector<8x1xf32>
        %c0_35 = arith.constant 0 : index
        %c0_36 = arith.constant 0 : index
        %44 = vector.load %arg9[%c0_35, %c0_36] : memref<8x1xf32, #tpu.memory_space<vmem>>, vector<8x1xf32>
        tpu.vector_store %arg9[%c0_35, %c0_36], %43 {strides = array<i32>} : memref<8x1xf32, #tpu.memory_space<vmem>>, vector<8x1xf32>,
        %cst_37 = arith.constant dense<0.000000e+00> : vector<8x256xf32>
        %45 = vector.multi_reduction <add>, %7, %cst_37 [0] : vector<2x8x256xf32> to vector<8x256xf32>
        %cst_38 = arith.constant dense<0.000000e+00> : vector<8xf32>
        %46 = vector.multi_reduction <add>, %45, %cst_38 [1] : vector<8x256xf32> to vector<8xf32>
        %47 = vector.shape_cast %46 : vector<8xf32> to vector<8x1xf32>
        %cst_39 = arith.constant 0.001953125 : f32
        %48 = vector.broadcast %cst_39 : f32 to vector<8x1xf32>
        %49 = arith.mulf %47, %48 : vector<8x1xf32>
        %c0_40 = arith.constant 0 : index
        %c0_41 = arith.constant 0 : index
        %50 = vector.load %arg10[%c0_40, %c0_41] : memref<8x1xf32, #tpu.memory_space<vmem>>, vector<8x1xf32>
        tpu.vector_store %arg10[%c0_40, %c0_41], %49 {strides = array<i32>} : memref<8x1xf32, #tpu.memory_space<vmem>>, vector<8x1xf32>,
      } else {
      }
      %c0_8 = arith.constant 0 : index
      %c0_9 = arith.constant 0 : index
      %13 = vector.load %arg10[%c0_8, %c0_9] : memref<8x1xf32, #tpu.memory_space<vmem>>, vector<8x1xf32>
      %14 = vector.shape_cast %13 : vector<8x1xf32> to vector<1x8x1xf32>
      %15 = vector.broadcast %14 : vector<1x8x1xf32> to vector<2x8x256xf32>
      %16 = arith.subf %7, %15 : vector<2x8x256xf32>
      %c0_10 = arith.constant 0 : index
      %c0_11 = arith.constant 0 : index
      %17 = vector.load %arg8[%c0_10, %c0_11] : memref<8x1xf32, #tpu.memory_space<vmem>>, vector<8x1xf32>
      %cst = arith.constant dense<0.000000e+00> : vector<8x256xf32>
      %18 = vector.multi_reduction <add>, %16, %cst [0] : vector<2x8x256xf32> to vector<8x256xf32>
      %cst_12 = arith.constant dense<0.000000e+00> : vector<8xf32>
      %19 = vector.multi_reduction <add>, %18, %cst_12 [1] : vector<8x256xf32> to vector<8xf32>
      %20 = vector.shape_cast %19 : vector<8xf32> to vector<8x1xf32>
      %21 = arith.addf %17, %20 : vector<8x1xf32>
      %c0_13 = arith.constant 0 : index
      %c0_14 = arith.constant 0 : index
      %22 = vector.load %arg8[%c0_13, %c0_14] : memref<8x1xf32, #tpu.memory_space<vmem>>, vector<8x1xf32>
      tpu.vector_store %arg8[%c0_13, %c0_14], %21 {strides = array<i32>} : memref<8x1xf32, #tpu.memory_space<vmem>>, vector<8x1xf32>,
      %c0_15 = arith.constant 0 : index
      %c0_16 = arith.constant 0 : index
      %23 = vector.load %arg9[%c0_15, %c0_16] : memref<8x1xf32, #tpu.memory_space<vmem>>, vector<8x1xf32>
      %24 = arith.mulf %16, %16 : vector<2x8x256xf32>
      %cst_17 = arith.constant dense<0.000000e+00> : vector<8x256xf32>
      %25 = vector.multi_reduction <add>, %24, %cst_17 [0] : vector<2x8x256xf32> to vector<8x256xf32>
      %cst_18 = arith.constant dense<0.000000e+00> : vector<8xf32>
      %26 = vector.multi_reduction <add>, %25, %cst_18 [1] : vector<8x256xf32> to vector<8xf32>
      %27 = vector.shape_cast %26 : vector<8xf32> to vector<8x1xf32>
      %28 = arith.addf %23, %27 : vector<8x1xf32>
      %c0_19 = arith.constant 0 : index
      %c0_20 = arith.constant 0 : index
      %29 = vector.load %arg9[%c0_19, %c0_20] : memref<8x1xf32, #tpu.memory_space<vmem>>, vector<8x1xf32>
      tpu.vector_store %arg9[%c0_19, %c0_20], %28 {strides = array<i32>} : memref<8x1xf32, #tpu.memory_space<vmem>>, vector<8x1xf32>,
      %c0_21 = arith.constant 0 : index
      %c0_22 = arith.constant 0 : index
      %c0_23 = arith.constant 0 : index
      %c0_24 = arith.constant 0 : index
      %30 = vector.load %arg4[%c0_21, %c0_22, %c0_23, %c0_24] : memref<1x2x8x256xf32, #tpu.memory_space<vmem>>, vector<1x2x8x256xf32>
      %31 = vector.shape_cast %30 : vector<1x2x8x256xf32> to vector<2x8x256xf32>
      %32 = arith.index_cast %arg2 : i32 to index
      %c0_25 = arith.constant 0 : index
      %c0_26 = arith.constant 0 : index
      %c0_27 = arith.constant 0 : index
      %33 = vector.load %arg13[%32, %c0_25, %c0_26, %c0_27] : memref<1x2x8x256xf32, #tpu.memory_space<vmem>>, vector<1x2x8x256xf32>
      %34 = vector.shape_cast %33 : vector<1x2x8x256xf32> to vector<2x8x256xf32>
      %35 = vector.shape_cast %31 : vector<2x8x256xf32> to vector<1x2x8x256xf32>
      tpu.vector_store %arg13[%32, %c0_25, %c0_26, %c0_27], %35 {strides = array<i32>} : memref<1x2x8x256xf32, #tpu.memory_space<vmem>>, vector<1x2x8x256xf32>,
      %c0_i32_28 = arith.constant 0 : i32
      %36 = arith.cmpi eq, %arg2, %c0_i32_28 : i32
      %c0_i32_29 = arith.constant 0 : i32
      %37 = arith.cmpi eq, %arg3, %c0_i32_29 : i32
      %38 = arith.andi %36, %37 : i1
      %39 = arith.extui %38 : i1 to i32
      %c0_i32_30 = arith.constant 0 : i32
      %40 = arith.cmpi ne, %39, %c0_i32_30 : i32
      scf.if %40 {
        %c0_31 = arith.constant 0 : index
        %c0_32 = arith.constant 0 : index
        %41 = vector.load %arg8[%c0_31, %c0_32] : memref<8x1xf32, #tpu.memory_space<vmem>>, vector<8x1xf32>
        %cst_33 = arith.constant 0.001953125 : f32
        %42 = vector.broadcast %cst_33 : f32 to vector<8x1xf32>
        %43 = arith.mulf %41, %42 : vector<8x1xf32>
        %c0_34 = arith.constant 0 : index
        %c0_35 = arith.constant 0 : index
        %44 = vector.load %arg9[%c0_34, %c0_35] : memref<8x1xf32, #tpu.memory_space<vmem>>, vector<8x1xf32>
        %cst_36 = arith.constant 0.001953125 : f32
        %45 = vector.broadcast %cst_36 : f32 to vector<8x1xf32>
        %46 = arith.mulf %44, %45 : vector<8x1xf32>
        %47 = arith.mulf %43, %43 : vector<8x1xf32>
        %48 = arith.subf %46, %47 : vector<8x1xf32>
        %cst_37 = arith.constant 9.99999974E-6 : f32
        %49 = vector.broadcast %cst_37 : f32 to vector<8x1xf32>
        %50 = arith.addf %48, %49 : vector<8x1xf32>
        %51 = math.rsqrt %50 : vector<8x1xf32>
        %c0_38 = arith.constant 0 : index
        %c0_39 = arith.constant 0 : index
        %c0_40 = arith.constant 0 : index
        %52 = vector.load %arg5[%c0_38, %c0_39, %c0_40] : memref<1x8x1xf32, #tpu.memory_space<vmem>>, vector<1x8x1xf32>
        %53 = vector.shape_cast %52 : vector<1x8x1xf32> to vector<8x1xf32>
        %c0_41 = arith.constant 0 : index
        %c0_42 = arith.constant 0 : index
        %c0_43 = arith.constant 0 : index
        %54 = vector.load %arg6[%c0_41, %c0_42, %c0_43] : memref<1x8x1xf32, #tpu.memory_space<vmem>>, vector<1x8x1xf32>
        %55 = vector.shape_cast %54 : vector<1x8x1xf32> to vector<8x1xf32>
        %56 = arith.mulf %53, %51 : vector<8x1xf32>
        %c0_44 = arith.constant 0 : index
        %c0_45 = arith.constant 0 : index
        %57 = vector.load %arg11[%c0_44, %c0_45] : memref<8x1xf32, #tpu.memory_space<vmem>>, vector<8x1xf32>
        tpu.vector_store %arg11[%c0_44, %c0_45], %56 {strides = array<i32>} : memref<8x1xf32, #tpu.memory_space<vmem>>, vector<8x1xf32>,
        %c0_46 = arith.constant 0 : index
        %c0_47 = arith.constant 0 : index
        %58 = vector.load %arg10[%c0_46, %c0_47] : memref<8x1xf32, #tpu.memory_space<vmem>>, vector<8x1xf32>
        %59 = arith.addf %58, %43 : vector<8x1xf32>
        %60 = arith.mulf %59, %56 : vector<8x1xf32>
        %61 = arith.subf %55, %60 : vector<8x1xf32>
        %c0_48 = arith.constant 0 : index
        %c0_49 = arith.constant 0 : index
        %62 = vector.load %arg12[%c0_48, %c0_49] : memref<8x1xf32, #tpu.memory_space<vmem>>, vector<8x1xf32>
        tpu.vector_store %arg12[%c0_48, %c0_49], %61 {strides = array<i32>} : memref<8x1xf32, #tpu.memory_space<vmem>>, vector<8x1xf32>,
      } else {
      }
    } else {
    }
    %c1_i32 = arith.constant 1 : i32
    %3 = arith.cmpi eq, %arg1, %c1_i32 : i32
    %4 = arith.extui %3 : i1 to i32
    %c0_i32_1 = arith.constant 0 : i32
    %5 = arith.cmpi ne, %4, %c0_i32_1 : i32
    scf.if %5 {
      %6 = arith.index_cast %arg2 : i32 to index
      %c0 = arith.constant 0 : index
      %c0_2 = arith.constant 0 : index
      %c0_3 = arith.constant 0 : index
      %7 = vector.load %arg13[%6, %c0, %c0_2, %c0_3] : memref<1x2x8x256xf32, #tpu.memory_space<vmem>>, vector<1x2x8x256xf32>
      %8 = vector.shape_cast %7 : vector<1x2x8x256xf32> to vector<2x8x256xf32>
      %c0_4 = arith.constant 0 : index
      %c0_5 = arith.constant 0 : index
      %9 = vector.load %arg11[%c0_4, %c0_5] : memref<8x1xf32, #tpu.memory_space<vmem>>, vector<8x1xf32>
      %10 = vector.shape_cast %9 : vector<8x1xf32> to vector<1x8x1xf32>
      %11 = vector.broadcast %10 : vector<1x8x1xf32> to vector<2x8x256xf32>
      %12 = arith.mulf %8, %11 : vector<2x8x256xf32>
      %c0_6 = arith.constant 0 : index
      %c0_7 = arith.constant 0 : index
      %13 = vector.load %arg12[%c0_6, %c0_7] : memref<8x1xf32, #tpu.memory_space<vmem>>, vector<8x1xf32>
      %14 = vector.shape_cast %13 : vector<8x1xf32> to vector<1x8x1xf32>
      %15 = vector.broadcast %14 : vector<1x8x1xf32> to vector<2x8x256xf32>
      %16 = arith.addf %12, %15 : vector<2x8x256xf32>
      %c0_8 = arith.constant 0 : index
      %c0_9 = arith.constant 0 : index
      %c0_10 = arith.constant 0 : index
      %c0_11 = arith.constant 0 : index
      %17 = vector.load %arg7[%c0_8, %c0_9, %c0_10, %c0_11] : memref<1x2x8x256xf32, #tpu.memory_space<vmem>>, vector<1x2x8x256xf32>
      %18 = vector.shape_cast %17 : vector<1x2x8x256xf32> to vector<2x8x256xf32>
      %19 = vector.shape_cast %16 : vector<2x8x256xf32> to vector<1x2x8x256xf32>
      tpu.vector_store %arg7[%c0_8, %c0_9, %c0_10, %c0_11], %19 {strides = array<i32>} : memref<1x2x8x256xf32, #tpu.memory_space<vmem>>, vector<1x2x8x256xf32>,
    } else {
    }
    return
  }
  func.func @transform_0(%arg0: i32, %arg1: i32, %arg2: i32, %arg3: i32) -> (i32, i32, i32, i32) {
    %c1_i32 = arith.constant 1 : i32
    %0 = arith.subi %c1_i32, %arg1 : i32
    %1 = arith.muli %0, %arg2 : i32
    %c1_i32_0 = arith.constant 1 : i32
    %2 = arith.subi %c1_i32_0, %arg1 : i32
    %3 = arith.muli %2, %arg3 : i32
    %c0_i32 = arith.constant 0 : i32
    %c0_i32_1 = arith.constant 0 : i32
    return %arg0, %1, %c0_i32, %3 : i32, i32, i32, i32
  }
  func.func @transform_1(%arg0: i32, %arg1: i32, %arg2: i32, %arg3: i32) -> (i32, i32, i32) {
    %c0_i32 = arith.constant 0 : i32
    %c0_i32_0 = arith.constant 0 : i32
    %c0_i32_1 = arith.constant 0 : i32
    return %arg0, %c0_i32, %c0_i32_0 : i32, i32, i32
  }
  func.func @transform_2(%arg0: i32, %arg1: i32, %arg2: i32, %arg3: i32) -> (i32, i32, i32) {
    %c0_i32 = arith.constant 0 : i32
    %c0_i32_0 = arith.constant 0 : i32
    %c0_i32_1 = arith.constant 0 : i32
    return %arg0, %c0_i32, %c0_i32_0 : i32, i32, i32
  }
  func.func @transform_3(%arg0: i32, %arg1: i32, %arg2: i32, %arg3: i32) -> (i32, i32, i32, i32) {
    %0 = arith.muli %arg1, %arg2 : i32
    %1 = arith.muli %arg1, %arg3 : i32
    %c0_i32 = arith.constant 0 : i32
    %c0_i32_0 = arith.constant 0 : i32
    return %arg0, %0, %c0_i32, %1 : i32, i32, i32, i32
  }
}

</mosaic_0001>

<llo_original>
// kernel: tpu_custom_call.1
$region0: #{tpu_custom_call.1}
  #allocation0 [shape = 'u32[]', space=smem, size = 0x4, offset = 0x4, fixed_abs, tag = 'smem constant byte address 0x4 - core index']
  #allocation1 [shape = 'u32[144,128]{1,0:T(1,128)}', space=vmem, size = 0x12000, scoped, tag = 'internal scratch']
  #allocation2 [shape = 'f32[8,1]{1,0:T(8,128)}', space=vmem, size = 0x1000, scoped, tag = 'scratch operand']
  #allocation3 [shape = 'f32[8,1]{1,0:T(8,128)}', space=vmem, size = 0x1000, scoped, tag = 'scratch operand']
  #allocation4 [shape = 'f32[8,1]{1,0:T(8,128)}', space=vmem, size = 0x1000, scoped, tag = 'scratch operand']
  #allocation5 [shape = 'f32[8,1]{1,0:T(8,128)}', space=vmem, size = 0x1000, scoped, tag = 'scratch operand']
  #allocation6 [shape = 'f32[8,1]{1,0:T(8,128)}', space=vmem, size = 0x1000, scoped, tag = 'scratch operand']
  #allocation7 [shape = 'f32[1,2,8,256]{3,2,1,0:T(8,128)}', space=vmem, size = 0x4000, scoped, tag = 'scratch operand']
  %s0 = inlined_call_operand.hbm [shape: f32[2,2,8,256], index: 0, kind: input, shape index: {}]
  %s1 = inlined_call_operand.vmem [shape: f32[2,8,1], index: 1, kind: input, shape index: {}]
  %s2 = inlined_call_operand.vmem [shape: f32[2,8,1], index: 2, kind: input, shape index: {}]
  %s3 = inlined_call_operand.hbm [shape: f32[2,2,8,256], index: 3, kind: output, shape index: {}]
  %s4 = sld [smem:[#allocation0]]
  $region65: #{tpu_custom_call.1} parent=0
    _
  %s6 = ssub.s32 1, %s4
  %s7 = scalar_select 0, %s6, %s4
  $region1: #{tpu_custom_call.1} parent=0
    #allocation8 [shape = 'u8[32768]{0}', space=vmem, size = 0x8000, scoped, tag = 'input window, operand 0']
    #allocation9 [shape = 's32[2]{0}', space=sflag, size = 0x8, scoped, tag = 'scoped memory for tpu_custom_call.1']
    #allocation10 [shape = 's32[2]{0}', space=sflag, size = 0x8, scoped, tag = 'scoped memory for tpu_custom_call.1']
    #allocation11 [shape = 'u8[32768]{0}', space=vmem, size = 0x8000, scoped, tag = 'output window, operand 0']
    %8 = vsyncpa [#allocation9], 0
    %s9 = scalar_lea.sflag [#allocation9], 1
    %10 = vsyncpa %s9, 0
    %11 = vsyncpa [#allocation10], 0
    %s12 = scalar_lea.sflag [#allocation10], 1
    %13 = vsyncpa %s12, 0
    loop: start=0, step=1, limit=6
    $region2: #{tpu_custom_call.1} parent=1 // loop_pre_header
      _
    $region3: #{tpu_custom_call.1} parent=1 // loop_header
      %s15 = sphi 0, %s19
      %p16 = scmp.ge.s32.totalorder %s15, 6
      %s22 = sphi 0, %s48
      %s23 = sphi 0, %s44
      %s24 = sphi 0, %s40
      %s25 = sphi 0, %s36
      %s26 = sphi 0, %s22
      %s27 = sphi 0, %s23
      %s28 = sphi 0, %s24
      %s29 = sphi 0, %s25
      %s30 = sphi 0, %s26
      %s31 = sphi 0, %s27
      %s32 = sphi 0, %s28
      %s33 = sphi 0, %s29
      %s61 = sphi 0, %s63
      %s64 = sphi 0, %s61
      %s65 = sphi 0, %s64
      %s81 = sphi 0, %s65
      %s87 = sphi 0, %s89
      %s90 = sphi 0, %s87
      %s91 = sphi 0, %s90
      %s107 = sphi 0, %s91
      %s113 = sphi 0, %s115
      %s116 = sphi 0, %s113
      %s117 = sphi 0, %s116
      %s133 = sphi 0, %s117
      %s147 = sphi 0, %s149
      %s150 = sphi 0, %s147
      %s151 = sphi 0, %s150
      %s167 = sphi 0, %s151
    $region4: #{tpu_custom_call.1} parent=1 // loop_header_branch
      %18 = sbr.rel (%p16) target = $region8
    $region5: #{tpu_custom_call.1} parent=1 // loop_body
      %s20 = ssub.s32 %s15, 1
      %s21 = ssub.s32 %s15, 2
      %s34 = sadd.s32 1, %s25
      %p35 = scmp.ge.s32.totalorder %s34, 1
      %s36 = scalar_select %p35, 0, %s34
      %s37 = sadd.s32 1, %s24
      %s38 = scalar_select %p35, %s37, %s24
      %p39 = scmp.ge.s32.totalorder %s38, 1
      %s40 = scalar_select %p39, 0, %s38
      %s41 = sadd.s32 1, %s23
      %s42 = scalar_select %p39, %s41, %s23
      %p43 = scmp.ge.s32.totalorder %s42, 2
      %s44 = scalar_select %p43, 0, %s42
      %s45 = sadd.s32 1, %s22
      %s46 = scalar_select %p43, %s45, %s22
      %p47 = scmp.ge.s32.totalorder %s46, 2
      %s48 = scalar_select %p47, 0, %s46
      %s49 = ssub.s32 1, %s23
      %s50 = smul.u32 %s49, %s24
      %s51 = smul.u32 %s49, %s25
      %s52 = ssub.s32 1, %s44
      %s53 = smul.u32 %s52, %s40
      %s54 = smul.u32 %s52, %s36
      %s55 = ssub.s32 %s22, %s48
      %s56 = ssub.s32 %s50, %s53
      %s57 = sor.u32 %s55, %s56
      %s58 = ssub.s32 %s51, %s54
      %s59 = sor.u32 %s57, %s58
      %p60 = scmp.eq.s32.totalorder %s59, 0
      %s62 = sadd.s32 %s61, 1
      %s63 = scalar_select %p60, %s61, %s62
      %p66 = pneg %p60
      %p67 = scmp.eq.s32.totalorder %s15, 3
      %p68 = por %p66, %p67
      %p69 = scmp.ne.s32.totalorder %s61, %s64
      %p70 = scmp.eq.s32.totalorder %s15, 0
      %p71 = por %p69, %p70
      %p72 = scmp.ne.s32.totalorder %s61, %s64
      %p73 = scmp.eq.s32.totalorder %s20, 3
      %p74 = por %p72, %p73
      %p75 = scmp.ne.s32.totalorder %s64, %s65
      %p76 = scmp.eq.s32.totalorder %s20, 0
      %p77 = por %p75, %p76
      %p78 = scmp.ne.s32.totalorder %s64, %s65
      %p79 = scmp.eq.s32.totalorder %s21, 3
      %p80 = por %p78, %p79
      %p82 = scmp.ne.s32.totalorder %s65, %s81
      %p83 = scmp.eq.s32.totalorder %s21, 0
      %p84 = por %p82, %p83
      %s85 = ssub.s32 %s22, %s48
      %p86 = scmp.eq.s32.totalorder %s85, 0
      %s88 = sadd.s32 %s87, 1
      %s89 = scalar_select %p86, %s87, %s88
      %p92 = pneg %p86
      %p93 = scmp.eq.s32.totalorder %s15, 3
      %p94 = por %p92, %p93
      %p95 = scmp.ne.s32.totalorder %s87, %s90
      %p96 = scmp.eq.s32.totalorder %s15, 0
      %p97 = por %p95, %p96
      %p98 = scmp.ne.s32.totalorder %s87, %s90
      %p99 = scmp.eq.s32.totalorder %s20, 3
      %p100 = por %p98, %p99
      %p101 = scmp.ne.s32.totalorder %s90, %s91
      %p102 = scmp.eq.s32.totalorder %s20, 0
      %p103 = por %p101, %p102
      %p104 = scmp.ne.s32.totalorder %s90, %s91
      %p105 = scmp.eq.s32.totalorder %s21, 3
      %p106 = por %p104, %p105
      %p108 = scmp.ne.s32.totalorder %s91, %s107
      %p109 = scmp.eq.s32.totalorder %s21, 0
      %p110 = por %p108, %p109
      %s111 = ssub.s32 %s22, %s48
      %p112 = scmp.eq.s32.totalorder %s111, 0
      %s114 = sadd.s32 %s113, 1
      %s115 = scalar_select %p112, %s113, %s114
      %p118 = pneg %p112
      %p119 = scmp.eq.s32.totalorder %s15, 3
      %p120 = por %p118, %p119
      %p121 = scmp.ne.s32.totalorder %s113, %s116
      %p122 = scmp.eq.s32.totalorder %s15, 0
      %p123 = por %p121, %p122
      %p124 = scmp.ne.s32.totalorder %s113, %s116
      %p125 = scmp.eq.s32.totalorder %s20, 3
      %p126 = por %p124, %p125
      %p127 = scmp.ne.s32.totalorder %s116, %s117
      %p128 = scmp.eq.s32.totalorder %s20, 0
      %p129 = por %p127, %p128
      %p130 = scmp.ne.s32.totalorder %s116, %s117
      %p131 = scmp.eq.s32.totalorder %s21, 3
      %p132 = por %p130, %p131
      %p134 = scmp.ne.s32.totalorder %s117, %s133
      %p135 = scmp.eq.s32.totalorder %s21, 0
      %p136 = por %p134, %p135
      %s137 = smul.u32 %s23, %s24
      %s138 = smul.u32 %s23, %s25
      %s139 = smul.u32 %s44, %s40
      %s140 = smul.u32 %s44, %s36
      %s141 = ssub.s32 %s22, %s48
      %s142 = ssub.s32 %s137, %s139
      %s143 = sor.u32 %s141, %s142
      %s144 = ssub.s32 %s138, %s140
      %s145 = sor.u32 %s143, %s144
      %p146 = scmp.eq.s32.totalorder %s145, 0
      %s148 = sadd.s32 %s147, 1
      %s149 = scalar_select %p146, %s147, %s148
      %p152 = pneg %p146
      %p153 = scmp.eq.s32.totalorder %s15, 3
      %p154 = por %p152, %p153
      %p155 = scmp.ne.s32.totalorder %s147, %s150
      %p156 = scmp.eq.s32.totalorder %s15, 0
      %p157 = por %p155, %p156
      %p158 = scmp.ne.s32.totalorder %s147, %s150
      %p159 = scmp.eq.s32.totalorder %s20, 3
      %p160 = por %p158, %p159
      %p161 = scmp.ne.s32.totalorder %s150, %s151
      %p162 = scmp.eq.s32.totalorder %s20, 0
      %p163 = por %p161, %p162
      %p164 = scmp.ne.s32.totalorder %s150, %s151
      %p165 = scmp.eq.s32.totalorder %s21, 3
      %p166 = por %p164, %p165
      %p168 = scmp.ne.s32.totalorder %s151, %s167
      %p169 = scmp.eq.s32.totalorder %s21, 0
      %p170 = por %p168, %p169
      %p171 = scmp.le.s32.totalorder 1, %s15
      %p172 = scmp.lt.s32.totalorder %s15, 5
      %p173 = pnand %p171, %p172
      %p174 = pneg %p173
      // Predicated region
      $region9: #{tpu_custom_call.1} parent=5 // pred_check
        _
      $region10: #{tpu_custom_call.1} parent=5 // pred_check_branch
        %176 = sbr.rel (%p173) target = $region12
      $region11: #{tpu_custom_call.1} parent=5 // pred_region
        %s177 = ssub.s32 %s15, 1
      $region12: #{tpu_custom_call.1} parent=5 // pred_fallthru
        _
      %p178 = scmp.lt.s32.totalorder %s15, 4
      // Predicated region
      $region13: #{tpu_custom_call.1} parent=5 // pred_check
        %p179 = pneg %p178
      $region14: #{tpu_custom_call.1} parent=5 // pred_check_branch
        %181 = sbr.rel (%p179) target = $region16
      $region15: #{tpu_custom_call.1} parent=5 // pred_region
        // Predicated region
        $region17: #{tpu_custom_call.1} parent=15 // pred_check
          %p182 = pneg %p71
        $region18: #{tpu_custom_call.1} parent=15 // pred_check_branch
          %184 = sbr.rel (%p182) target = $region20
        $region19: #{tpu_custom_call.1} parent=15 // pred_region
          %s185 = sand.u32 %s61, 1
          %s186 = scalar_lea.sflag [#allocation9], %s185
          %s187 = sand.u32 %s61, 1
          %s188 = smul.addr %s187, 32
          %s189 = scalar_lea.vmem [#allocation8], %s188
          %s190 = ssub.s32 1, %s23
          %s191 = smul.u32 %s190, %s24
          %s192 = smul.u32 %s190, %s25
          %s193 = smul.u32 2, %s191
          %s194 = smul.u32 2, %s192
          %s196 = ssub.s32 512, 512
          %197 = vsyncadd %s186, %s196
          %s198 = smul.addr %s193, 2
          %s199 = sadd.s32 %s194, %s198
          %s200 = smul.addr %s22, 4
          %s201 = sadd.s32 %s199, %s200
          %s202 = smul.addr %s201, 128
          %s203 = scalar_lea.hbm %s0, %s202
          %s204 = sshll.u32 %s189, 4
          %s205 = int_to_ptr.vmem [resolvable:$true] %s204
          %210 = dma.hbm_to_vmem [thread:$0]  %s203, 512, %s205, %s186, 256, 256, 16
        $region20: #{tpu_custom_call.1} parent=15 // pred_fallthru
          _
        // Predicated region
        $region21: #{tpu_custom_call.1} parent=15 // pred_check
          %p211 = pneg %p97
        $region22: #{tpu_custom_call.1} parent=15 // pred_check_branch
          %213 = sbr.rel (%p211) target = $region24
        $region23: #{tpu_custom_call.1} parent=15 // pred_region
          %p214 = scmp.lt.s32.totalorder %s22, 1
          %s215 = scalar_select %p214, %s22, 1
          %s216 = smul.addr %s215, 8
          %s217 = scalar_lea.vmem %s1, %s216
        $region24: #{tpu_custom_call.1} parent=15 // pred_fallthru
          _
        // Predicated region
        $region25: #{tpu_custom_call.1} parent=15 // pred_check
          %p218 = pneg %p123
        $region26: #{tpu_custom_call.1} parent=15 // pred_check_branch
          %220 = sbr.rel (%p218) target = $region28
        $region27: #{tpu_custom_call.1} parent=15 // pred_region
          %p221 = scmp.lt.s32.totalorder %s22, 1
          %s222 = scalar_select %p221, %s22, 1
          %s223 = smul.addr %s222, 8
          %s224 = scalar_lea.vmem %s2, %s223
        $region28: #{tpu_custom_call.1} parent=15 // pred_fallthru
          _
      $region16: #{tpu_custom_call.1} parent=5 // pred_fallthru
        _
      %p225 = scmp.le.s32.totalorder 1, %s15
      %p226 = scmp.lt.s32.totalorder %s15, 5
      %p227 = pnand %p225, %p226
      %p228 = pneg %p227
      // Predicated region
      $region29: #{tpu_custom_call.1} parent=5 // pred_check
        _
      $region30: #{tpu_custom_call.1} parent=5 // pred_check_branch
        %230 = sbr.rel (%p227) target = $region32
      $region31: #{tpu_custom_call.1} parent=5 // pred_region
        %s231 = ssub.s32 %s15, 1
        %s232 = sand.u32 %s64, 1
        %s233 = scalar_lea.sflag [#allocation9], %s232
        %s234 = sand.u32 %s64, 1
        %s235 = smul.addr %s234, 32
        %s236 = scalar_lea.vmem [#allocation8], %s235
        // Predicated region
        $region33: #{tpu_custom_call.1} parent=31 // pred_check
          %p237 = pneg %p77
        $region34: #{tpu_custom_call.1} parent=31 // pred_check_branch
          %239 = sbr.rel (%p237) target = $region36
        $region35: #{tpu_custom_call.1} parent=31 // pred_region
          %240 = dma.done %s233, 512
        $region36: #{tpu_custom_call.1} parent=31 // pred_fallthru
          _
        %s241 = sand.u32 %s64, 1
        %s242 = scalar_lea.sflag [#allocation9], %s241
        %s243 = sand.u32 %s64, 1
        %s244 = smul.addr %s243, 32
        %s245 = scalar_lea.vmem [#allocation8], %s244
        %p246 = pneg %p77
        %p247 = pneg %p74
        %p248 = scmp.lt.s32.totalorder %s26, 1
        %s249 = scalar_select %p248, %s26, 1
        %s250 = smul.addr %s249, 8
        %s251 = scalar_lea.vmem %s1, %s250
        %p252 = pneg %p103
        %p253 = pneg %p100
        %p254 = scmp.lt.s32.totalorder %s26, 1
        %s255 = scalar_select %p254, %s26, 1
        %s256 = smul.addr %s255, 8
        %s257 = scalar_lea.vmem %s2, %s256
        %p258 = pneg %p129
        %p259 = pneg %p126
        %p260 = pneg %p163
        %p261 = pneg %p160
        %s262 = sand.u32 %s150, 1
        %s263 = scalar_lea.sflag [#allocation10], %s262
        %s264 = sand.u32 %s150, 1
        %s265 = smul.addr %s264, 32
        %s266 = scalar_lea.vmem [#allocation11], %s265
        %s267 = ssub.s32 1, %s27
        %s268 = smul.u32 %s267, %s28
        %s269 = smul.u32 %s267, %s29
        %s270 = smul.u32 2, %s268
        %s271 = smul.u32 2, %s269
        %p272 = scmp.lt.s32.totalorder %s26, 1
        %s273 = scalar_select %p272, %s26, 1
        %s274 = smul.addr %s273, 8
        %s275 = scalar_lea.vmem %s1, %s274
        %p276 = scmp.lt.s32.totalorder %s26, 1
        %s277 = scalar_select %p276, %s26, 1
        %s278 = smul.addr %s277, 8
        %s279 = scalar_lea.vmem %s2, %s278
        %s280 = smul.u32 %s27, %s28
        %s281 = smul.u32 %s27, %s29
        %s282 = smul.u32 2, %s280
        %s283 = smul.u32 2, %s281
        %p284 = scmp.eq.s32.totalorder %s27, 0
        // Predicated region
        $region37: #{tpu_custom_call.1} parent=31 // pred_check
          %p285 = pneg %p284
        $region38: #{tpu_custom_call.1} parent=31 // pred_check_branch
          %287 = sbr.rel (%p285) target = $region40
        $region39: #{tpu_custom_call.1} parent=31 // pred_region
          %v288 = vld [vmem:[%s236] sm:$0xff]
          %v289 = vld [vmem:[%s236 + $0x8] sm:$0xff]
          %v290 = vld [vmem:[%s236 + $0x10] sm:$0xff]
          %v291 = vld [vmem:[%s236 + $0x18] sm:$0xff]
          %p292 = scmp.eq.s32.totalorder %s28, 0
          %p293 = scmp.eq.s32.totalorder %s29, 0
          %p294 = pnand %p292, %p293
          %p295 = pneg %p294
          // Predicated region
          $region41: #{tpu_custom_call.1} parent=39 // pred_check
            _
          $region42: #{tpu_custom_call.1} parent=39 // pred_check_branch
            %297 = sbr.rel (%p294) target = $region44
          $region43: #{tpu_custom_call.1} parent=39 // pred_region
            %vm298 = vcmask 7168
            %299 = vst.msk [vmem:[#allocation2] sm:$0xff] %vm298, 0.0
            %300 = vst.msk [vmem:[#allocation3] sm:$0xff] %vm298, 0.0
            %v301 = vadd.f32 %v288, %v290
            %v302 = vadd.f32 %v289, %v291
            %v303 = vadd.f32 %v301, %v302
            %304 = vadd.xlane.f32.xlu0 %v303
            %v305 = vpop.xlane.xlu0 %304
            %v306 = vmul.f32 %v305, 0.001953125
            %307 = vst.msk [vmem:[#allocation4] sm:$0xff] %vm298, %v306
          $region44: #{tpu_custom_call.1} parent=39 // pred_fallthru
            _
          %v308 = vld [vmem:[#allocation4] sm:$0xff]
          %310 = vset.pattern.permute.xlu0 0
          %311 = vperm.xlu0 %310, %v308
          %v312 = vpop.permute.xlu0 %311
          %v314 = vsub.f32 %v288, %v312
          %v315 = vsub.f32 %v289, %v312
          %v316 = vsub.f32 %v290, %v312
          %v317 = vsub.f32 %v291, %v312
          %v318 = vld [vmem:[#allocation2] sm:$0xff]
          %v319 = vadd.f32 %v314, %v316
          %v320 = vadd.f32 %v315, %v317
          %v321 = vadd.f32 %v319, %v320
          %322 = vadd.xlane.f32.xlu0 %v321
          %v323 = vpop.xlane.xlu0 %322
          %v324 = vadd.f32 %v318, %v323
          %vm325 = vcmask 7168
          %326 = vst.msk [vmem:[#allocation2] sm:$0xff] %vm325, %v324
          %v327 = vld [vmem:[#allocation3] sm:$0xff]
          %v328 = vmul.f32 %v314, %v314
          %v329 = vmul.f32 %v315, %v315
          %v330 = vmul.f32 %v316, %v316
          %v331 = vmul.f32 %v317, %v317
          %v332 = vadd.f32 %v328, %v330
          %v333 = vadd.f32 %v329, %v331
          %v334 = vadd.f32 %v332, %v333
          %335 = vadd.xlane.f32.xlu0 %v334
          %v336 = vpop.xlane.xlu0 %335
          %v337 = vadd.f32 %v327, %v336
          %338 = vst.msk [vmem:[#allocation3] sm:$0xff] %vm325, %v337
          %v339 = vld [vmem:[%s236] sm:$0xff]
          %v340 = vld [vmem:[%s236 + $0x8] sm:$0xff]
          %v341 = vld [vmem:[%s236 + $0x10] sm:$0xff]
          %v342 = vld [vmem:[%s236 + $0x18] sm:$0xff]
          %s343 = smul.u32 %s28, 4
          %s344 = smul.addr %s343, 8
          %s345 = scalar_lea.vmem [#allocation7], %s344
          %346 = vst [vmem:[%s345] sm:$0xff] %v339
          %347 = vst [vmem:[%s345 + $0x8] sm:$0xff] %v340
          %348 = vst [vmem:[%s345 + $0x10] sm:$0xff] %v341
          %349 = vst [vmem:[%s345 + $0x18] sm:$0xff] %v342
          // Predicated region
          $region45: #{tpu_custom_call.1} parent=39 // pred_check
            _
          $region46: #{tpu_custom_call.1} parent=39 // pred_check_branch
            %351 = sbr.rel (%p294) target = $region48
          $region47: #{tpu_custom_call.1} parent=39 // pred_region
            %v352 = vld [vmem:[#allocation2] sm:$0xff]
            %v353 = vmul.f32 %v352, 0.001953125
            %v354 = vld [vmem:[#allocation3] sm:$0xff]
            %v355 = vmul.f32 %v354, 0.001953125
            %v356 = vmul.f32 %v353, %v353
            %v357 = vsub.f32 %v355, %v356
            %v358 = vadd.f32 %v357, 1e-05
            %v359 = vrsqrt.pop %v358
            %v360 = vld [vmem:[%s275] sm:$0xff]
            %v361 = vld [vmem:[%s279] sm:$0xff]
            %v362 = vmul.f32 %v360, %v359
            %363 = vst.msk [vmem:[#allocation5] sm:$0xff] %vm325, %v362
            %v364 = vld [vmem:[#allocation4] sm:$0xff]
            %v365 = vadd.f32 %v364, %v353
            %v366 = vmul.f32 %v365, %v362
            %v367 = vsub.f32 %v361, %v366
            %368 = vst.msk [vmem:[#allocation6] sm:$0xff] %vm325, %v367
          $region48: #{tpu_custom_call.1} parent=39 // pred_fallthru
            _
        $region40: #{tpu_custom_call.1} parent=31 // pred_fallthru
          _
        %p369 = scmp.eq.s32.totalorder %s27, 1
        // Predicated region
        $region49: #{tpu_custom_call.1} parent=31 // pred_check
          %p370 = pneg %p369
        $region50: #{tpu_custom_call.1} parent=31 // pred_check_branch
          %372 = sbr.rel (%p370) target = $region52
        $region51: #{tpu_custom_call.1} parent=31 // pred_region
          %s373 = smul.u32 %s28, 4
          %s374 = smul.addr %s373, 8
          %s375 = scalar_lea.vmem [#allocation7], %s374
          %v376 = vld [vmem:[%s375] sm:$0xff]
          %v377 = vld [vmem:[%s375 + $0x8] sm:$0xff]
          %v378 = vld [vmem:[%s375 + $0x10] sm:$0xff]
          %v379 = vld [vmem:[%s375 + $0x18] sm:$0xff]
          %v380 = vld [vmem:[#allocation5] sm:$0xff]
          %382 = vset.pattern.permute.xlu0 0
          %383 = vperm.xlu0 %382, %v380
          %v384 = vpop.permute.xlu0 %383
          %v386 = vmul.f32 %v376, %v384
          %v387 = vmul.f32 %v377, %v384
          %v388 = vmul.f32 %v378, %v384
          %v389 = vmul.f32 %v379, %v384
          %v390 = vld [vmem:[#allocation6] sm:$0xff]
          %392 = vset.pattern.permute.xlu0 0
          %393 = vperm.xlu0 %392, %v390
          %v394 = vpop.permute.xlu0 %393
          %v396 = vadd.f32 %v386, %v394
          %v397 = vadd.f32 %v387, %v394
          %v398 = vadd.f32 %v388, %v394
          %v399 = vadd.f32 %v389, %v394
          %400 = vst [vmem:[%s266] sm:$0xff] %v396
          %401 = vst [vmem:[%s266 + $0x8] sm:$0xff] %v397
          %402 = vst [vmem:[%s266 + $0x10] sm:$0xff] %v398
          %403 = vst [vmem:[%s266 + $0x18] sm:$0xff] %v399
        $region52: #{tpu_custom_call.1} parent=31 // pred_fallthru
          _
        %s404 = sand.u32 %s150, 1
        %s405 = scalar_lea.sflag [#allocation10], %s404
        %s406 = sand.u32 %s150, 1
        %s407 = smul.addr %s406, 32
        %s408 = scalar_lea.vmem [#allocation11], %s407
        // Predicated region
        $region53: #{tpu_custom_call.1} parent=31 // pred_check
          %p409 = pneg %p160
        $region54: #{tpu_custom_call.1} parent=31 // pred_check_branch
          %411 = sbr.rel (%p409) target = $region56
        $region55: #{tpu_custom_call.1} parent=31 // pred_region
          %s412 = smul.u32 %s27, %s28
          %s413 = smul.u32 %s27, %s29
          %s414 = smul.u32 2, %s412
          %s415 = smul.u32 2, %s413
          %s417 = ssub.s32 512, 512
          %418 = vsyncadd %s405, %s417
          %s419 = smul.addr %s414, 2
          %s420 = sadd.s32 %s415, %s419
          %s421 = smul.addr %s26, 4
          %s422 = sadd.s32 %s420, %s421
          %s423 = smul.addr %s422, 128
          %s424 = scalar_lea.hbm %s3, %s423
          %s425 = sshll.u32 %s408, 4
          %s426 = int_to_ptr.vmem [resolvable:$true] %s425
          %431 = dma.vmem_to_hbm [thread:$0]  %s426, 512, %s424, %s405, 256, 256, 16
        $region56: #{tpu_custom_call.1} parent=31 // pred_fallthru
          _
      $region32: #{tpu_custom_call.1} parent=5 // pred_fallthru
        _
      %p432 = scmp.le.s32.totalorder 2, %s15
      // Predicated region
      $region57: #{tpu_custom_call.1} parent=5 // pred_check
        %p433 = pneg %p432
      $region58: #{tpu_custom_call.1} parent=5 // pred_check_branch
        %435 = sbr.rel (%p433) target = $region60
      $region59: #{tpu_custom_call.1} parent=5 // pred_region
        %s436 = ssub.s32 %s15, 2
        // Predicated region
        $region61: #{tpu_custom_call.1} parent=59 // pred_check
          %p437 = pneg %p166
        $region62: #{tpu_custom_call.1} parent=59 // pred_check_branch
          %439 = sbr.rel (%p437) target = $region64
        $region63: #{tpu_custom_call.1} parent=59 // pred_region
          %s440 = sand.u32 %s151, 1
          %s441 = scalar_lea.sflag [#allocation10], %s440
          %s442 = sand.u32 %s151, 1
          %s443 = smul.addr %s442, 32
          %s444 = scalar_lea.vmem [#allocation11], %s443
          %445 = dma.done %s441, 512
        $region64: #{tpu_custom_call.1} parent=59 // pred_fallthru
          _
      $region60: #{tpu_custom_call.1} parent=5 // pred_fallthru
        _
    $region6: #{tpu_custom_call.1} parent=1 // loop_footer
      %s19 = sadd.s32 1, %s15
    $region7: #{tpu_custom_call.1} parent=1 // loop_footer_branch
      %14 = sbr.rel target = $region3
    $region8: #{tpu_custom_call.1} parent=1 // loop_exit
      _
    %446 = vsyncpa [#allocation9], 1
    %s447 = scalar_lea.sflag [#allocation9], 1
    %448 = vsyncpa %s447, 1
    %449 = vsyncpa [#allocation10], 1
    %s450 = scalar_lea.sflag [#allocation10], 1
    %451 = vsyncpa %s450, 1

</llo_original>
